<compile_context>
chip_gen: v7x
topology: tpu7x:2x2x1
jax: 0.10.0
libtpu: 0.0.40
codegen_flags: <defaults>
</compile_context>

<pallas_src>
import functools
import math

import jax
import jax.numpy as jnp
from jax.experimental import pallas as pl
from jax.experimental.pallas import tpu as pltpu

_EPS = 10e-8  # matches the reference Sparse_attention


# --------------------------------------------------------------------------------------
# kernel helpers
# --------------------------------------------------------------------------------------
def _sparse_softmax(scores, *, top_k, lk, eps):
    """Row-wise softmax followed by Sparse_attention top-k re-normalization (fused).

    scores: (TB, TQ, Lk) f32.
    """
    m = jnp.max(scores, axis=-1, keepdims=True)
    e = jnp.exp(scores - m)                      # values in (0, 1], strictly > 0
    s = jnp.sum(e, axis=-1, keepdims=True)       # softmax denominator

    if lk <= top_k:
        # Sparse_attention is the identity -> plain softmax.
        return e * pl.reciprocal(s, approx=True)

    # kth largest of each row of `e` (same ranking as the softmax probabilities).
    # One XLU reduction per iteration; masked-out elements are set to 0.0 (safe lower
    # bound for exp() values) so no -inf can propagate if a row runs out of values.
    work = e
    kth = None
    for i in range(top_k):
        kth = jnp.max(work, axis=-1, keepdims=True)
        if i + 1 < top_k:
            work = jnp.where(work == kth, 0.0, work)

    # Fused thresholding + renormalization in the un-normalized exp() domain:
    #   attn_j = e_j / s, kth_attn = kth / s
    #   w_j    = max(attn_j - kth_attn - eps, 0) = max(e_j - kth - eps*s, 0) / s
    #   out_j  = w_j / (sum(w) + eps)            = W_j / (sum(W) + eps*s)
    eps_s = eps * s
    thr = kth + eps_s
    w = jnp.maximum(e - thr, 0.0)
    denom = jnp.sum(w, axis=-1, keepdims=True) + eps_s
    return w * pl.reciprocal(denom, approx=True)


def _attention_tile(q_ref, k_ref, v_ref, *, inv_temperature, top_k, lk, eps):
    # q_ref: (TB, TQ, D), k_ref: (TB, Lk, D), v_ref: (TB, Lk, Dv).
    # MXU matmuls run in the input dtype (bf16 on v6e/v7x) with f32 accumulation.
    scores = jnp.einsum(
        "bqd,bkd->bqk", q_ref[...], k_ref[...],
        preferred_element_type=jnp.float32,
    ) * inv_temperature
    attn = _sparse_softmax(scores, top_k=top_k, lk=lk, eps=eps)
    out = jnp.einsum(
        "bqk,bkd->bqd", attn.astype(v_ref.dtype), v_ref[...],
        preferred_element_type=jnp.float32,
    )
    return out, attn


def _sdpa_kernel_with_attn(q_ref, k_ref, v_ref, out_ref, attn_ref, *,
                           inv_temperature, top_k, lk, eps):
    out, attn = _attention_tile(q_ref, k_ref, v_ref,
                                inv_temperature=inv_temperature,
                                top_k=top_k, lk=lk, eps=eps)
    out_ref[...] = out.astype(out_ref.dtype)
    attn_ref[...] = attn.astype(attn_ref.dtype)


def _sdpa_kernel_out_only(q_ref, k_ref, v_ref, out_ref, *,
                          inv_temperature, top_k, lk, eps):
    out, _ = _attention_tile(q_ref, k_ref, v_ref,
                             inv_temperature=inv_temperature,
                             top_k=top_k, lk=lk, eps=eps)
    out_ref[...] = out.astype(out_ref.dtype)


# --------------------------------------------------------------------------------------
# tile selection
# --------------------------------------------------------------------------------------
def _divisors_desc(n):
    ds = set()
    i = 1
    while i * i <= n:
        if n % i == 0:
            ds.add(i)
            ds.add(n // i)
        i += 1
    return sorted(ds, reverse=True)


def _choose_tiles(B, Lq, Lk, D, Dv, isz, return_attn, budget):
    """Pick (batch_tile, q_tile, est_vmem_bytes) under a VMEM working budget."""
    isz_q, isz_k, isz_v, isz_o, isz_a = isz

    def step_bytes(tb, tq):
        kv = 2 * tb * Lk * (D * isz_k + Dv * isz_v)            # double-buffered k/v blocks
        qb = 2 * tb * tq * D * isz_q                           # q block
        ob = 2 * tb * tq * Dv * isz_o                          # out block
        ab = 2 * tb * tq * Lk * isz_a if return_attn else 0    # attn block
        tmp = 6 * tb * tq * Lk * 4 + 4 * tb * tq * 4           # f32 temporaries
        return kv + qb + ob + ab + tmp

    # q tile must be a multiple of 8 or equal to Lq (layout rule on 2nd-to-last dim).
    q_cands = [t for t in _divisors_desc(Lq) if t == Lq or t % 8 == 0] or [Lq]
    tq = next((t for t in q_cands if step_bytes(1, t) <= budget), q_cands[-1])

    b_cands = _divisors_desc(B)
    # Keep at least two grid steps when possible so both v7x TensorCores get work.
    if Lq // tq == 1 and B > 1:
        b_cands = [t for t in b_cands if B // t >= 2] or [1]
    tb = next((t for t in b_cands if step_bytes(t, tq) <= budget), 1)
    return tb, tq, step_bytes(tb, tq)


# --------------------------------------------------------------------------------------
# wrapper
# --------------------------------------------------------------------------------------
def scaled_dot_product_attention(q, k, v, *, temperature, topk,
                                 return_attn=True, attn_dtype=None,
                                 q_tile=None, b_tile=None):
    """q: (B, Lq, D), k: (B, Lk, D), v: (B, Lk, Dv). Returns (out, attn, extra_loss)."""
    B, Lq, D = q.shape
    Bk, Lk, Dk = k.shape
    Bv, Lkv, Dv = v.shape
    assert D == Dk and Bk == B and Bv == B and Lkv == Lk

    top_k = int(topk) + 1  # Sparse_attention.__init__ does `top_k += 1`
    out_dtype = q.dtype
    attn_dtype = q.dtype if attn_dtype is None else jnp.dtype(attn_dtype)

    isz = (jnp.dtype(q.dtype).itemsize, jnp.dtype(k.dtype).itemsize,
           jnp.dtype(v.dtype).itemsize, jnp.dtype(out_dtype).itemsize,
           jnp.dtype(attn_dtype).itemsize)
    budget = 24 * 1024 * 1024  # conservative working budget (v7x has 64 MiB VMEM/TC)
    auto_tb, auto_tq, est_vmem = _choose_tiles(B, Lq, Lk, D, Dv, isz, return_attn, budget)
    tq = auto_tq if q_tile is None else int(q_tile)
    tb = auto_tb if b_tile is None else int(b_tile)
    assert Lq % tq == 0, "q_tile must divide Lq"
    assert B % tb == 0, "b_tile must divide B"

    vmem_limit = None
    if est_vmem > 16 * 1024 * 1024:  # above the most conservative default scoped limit
        vmem_limit = min(64 * 1024 * 1024, max(32 * 1024 * 1024, int(est_vmem * 1.5)))

    compiler_params = pltpu.CompilerParams(
        dimension_semantics=("parallel", "parallel"),
        vmem_limit_bytes=vmem_limit,
    )

    grid = (B // tb, Lq // tq)
    in_specs = [
        pl.BlockSpec((tb, tq, D), lambda b, qi: (b, qi, 0)),
        pl.BlockSpec((tb, Lk, D), lambda b, qi: (b, 0, 0)),   # k resident across q-tiles
        pl.BlockSpec((tb, Lk, Dv), lambda b, qi: (b, 0, 0)),  # v resident across q-tiles
    ]
    kernel_kwargs = dict(inv_temperature=1.0 / float(temperature),
                         top_k=top_k, lk=int(Lk), eps=_EPS)

    if return_attn:
        kernel = functools.partial(_sdpa_kernel_with_attn, **kernel_kwargs)
        out, attn = pl.pallas_call(
            kernel,
            out_shape=(
                jax.ShapeDtypeStruct((B, Lq, Dv), out_dtype),
                jax.ShapeDtypeStruct((B, Lq, Lk), attn_dtype),
            ),
            grid=grid,
            in_specs=in_specs,
            out_specs=(
                pl.BlockSpec((tb, tq, Dv), lambda b, qi: (b, qi, 0)),
                pl.BlockSpec((tb, tq, Lk), lambda b, qi: (b, qi, 0)),
            ),
            compiler_params=compiler_params,
        )(q, k, v)
        return out, attn, 0.0

    kernel = functools.partial(_sdpa_kernel_out_only, **kernel_kwargs)
    out = pl.pallas_call(
        kernel,
        out_shape=jax.ShapeDtypeStruct((B, Lq, Dv), out_dtype),
        grid=grid,
        in_specs=in_specs,
        out_specs=pl.BlockSpec((tb, tq, Dv), lambda b, qi: (b, qi, 0)),
        compiler_params=compiler_params,
    )(q, k, v)
    return out, None, 0.0


# --------------------------------------------------------------------------------------
# pure-JAX reference (exact divides, jax.lax.top_k) of the PyTorch forward
# --------------------------------------------------------------------------------------
def _reference(q, k, v, temperature, topk):
    attn = jnp.einsum("bqd,bkd->bqk", q, k) / temperature
    attn = jax.nn.softmax(attn, axis=2)
    B, Lq, Lk = attn.shape
    top_k = topk + 1
    flat = attn.reshape(B * Lq, Lk)
    if Lk <= top_k:
        sp = flat
    else:
        kth = jax.lax.top_k(flat, top_k)[0][:, -1:]
        delta = kth + _EPS
        w = jnp.maximum(flat - delta, 0.0)
        sp = w / (jnp.sum(w, axis=1, keepdims=True) + _EPS)
    attn = sp.reshape(B, Lq, Lk)
    out = jnp.einsum("bqk,bkd->bqd", attn, v)
    return out, attn


if __name__ == "__main__":
    # ---- case 1: small shapes consistent with the module's bmm-based forward ---------
    B, Lq, Lk, D, Dv = 2, 8, 8, 32, 32
    topk = 3
    temperature = math.sqrt(D)

    key = jax.random.PRNGKey(0)
    kq, kk, kv = jax.random.split(key, 3)
    q = jax.random.normal(kq, (B, Lq, D), dtype=jnp.float32)
    k = jax.random.normal(kk, (B, Lk, D), dtype=jnp.float32)
    v = jax.random.normal(kv, (B, Lk, Dv), dtype=jnp.float32)

    out, attn, extra_loss = scaled_dot_product_attention(
        q, k, v, temperature=temperature, topk=topk
    )
    out = jax.block_until_ready(out)
    attn = jax.block_until_ready(attn)

    ref_out, ref_attn = _reference(q, k, v, temperature, topk)
    assert out.shape == (B, Lq, Dv) and attn.shape == (B, Lq, Lk)
    # Tolerance accounts for the EUP approx reciprocal used for the (re)normalization.
    assert jnp.allclose(attn, ref_attn, atol=1e-2, rtol=1e-2)
    assert jnp.allclose(out, ref_out, atol=1e-2, rtol=1e-2)

    # Also exercise the output-only fast path (skips the attention-matrix writeback).
    out2, attn2, _ = scaled_dot_product_attention(
        q, k, v, temperature=temperature, topk=topk, return_attn=False
    )
    out2 = jax.block_until_ready(out2)
    assert attn2 is None
    assert jnp.allclose(out2, ref_out, atol=1e-2, rtol=1e-2)

    # ---- case 2: exercises the batch-tiled (TB > 1) path ------------------------------
    B2, Lq2, Lk2, D2, Dv2 = 4, 16, 16, 32, 32
    topk2 = 2
    temperature2 = math.sqrt(D2)
    kq2, kk2, kv2 = jax.random.split(jax.random.PRNGKey(1), 3)
    q2 = jax.random.normal(kq2, (B2, Lq2, D2), dtype=jnp.float32)
    k2 = jax.random.normal(kk2, (B2, Lk2, D2), dtype=jnp.float32)
    v2 = jax.random.normal(kv2, (B2, Lk2, Dv2), dtype=jnp.float32)

    out3, attn3, _ = scaled_dot_product_attention(
        q2, k2, v2, temperature=temperature2, topk=topk2
    )
    out3 = jax.block_until_ready(out3)
    ref_out3, ref_attn3 = _reference(q2, k2, v2, temperature2, topk2)
    assert jnp.allclose(attn3, ref_attn3, atol=1e-2, rtol=1e-2)
    assert jnp.allclose(out3, ref_out3, atol=1e-2, rtol=1e-2)

    print("KERNEL_OK")
</pallas_src>

<mosaic_0001>
module attributes {stable_mosaic.version = 11 : i64} {
  func.func @_sdpa_kernel_with_attn(%arg0: i32, %arg1: i32, %arg2: memref<1x8x32xf32, #tpu.memory_space<vmem>>, %arg3: memref<1x8x32xf32, #tpu.memory_space<vmem>>, %arg4: memref<1x8x32xf32, #tpu.memory_space<vmem>>, %arg5: memref<1x8x32xf32, #tpu.memory_space<vmem>>, %arg6: memref<1x8x8xf32, #tpu.memory_space<vmem>>) attributes {dimension_semantics = [#tpu.dimension_semantics<parallel>, #tpu.dimension_semantics<parallel>], iteration_bounds = array<i64: 2, 1>, scalar_prefetch = 0 : i64, scratch_operands = 0 : i64, tpu.core_type = #tpu.core_type<tc>, window_params = [{transform_indices = @transform_0, window_bounds = array<i64: 1, 8, 32>}, {transform_indices = @transform_1, window_bounds = array<i64: 1, 8, 32>}, {transform_indices = @transform_2, window_bounds = array<i64: 1, 8, 32>}, {transform_indices = @transform_3, window_bounds = array<i64: 1, 8, 32>}, {transform_indices = @transform_4, window_bounds = array<i64: 1, 8, 8>}]} {
    %c0 = arith.constant 0 : index
    %c0_0 = arith.constant 0 : index
    %c0_1 = arith.constant 0 : index
    %0 = vector.load %arg2[%c0, %c0_0, %c0_1] : memref<1x8x32xf32, #tpu.memory_space<vmem>>, vector<1x8x32xf32>
    %c0_2 = arith.constant 0 : index
    %c0_3 = arith.constant 0 : index
    %c0_4 = arith.constant 0 : index
    %1 = vector.load %arg3[%c0_2, %c0_3, %c0_4] : memref<1x8x32xf32, #tpu.memory_space<vmem>>, vector<1x8x32xf32>
    "tpu.trace_start"() <{level = 10 : i32, message = "bqd,bkd->bqk"}> : () -> ()
    %cst = arith.constant dense<0.000000e+00> : vector<1x8x8xf32>
    %2 = tpu.matmul %0, %1, %cst {dimension_numbers = #tpu.dot_dimension_numbers<[2], [2], [1], [1], [0, 0, 0, 1, 1, 1], [0], [0]>} : vector<1x8x32xf32>, vector<1x8x32xf32>, vector<1x8x8xf32> -> vector<1x8x8xf32>
    "tpu.trace_stop"() : () -> ()
    %cst_5 = arith.constant 0.176776692 : f32
    %3 = vector.broadcast %cst_5 : f32 to vector<1x8x8xf32>
    %4 = arith.mulf %2, %3 : vector<1x8x8xf32>
    %cst_6 = arith.constant dense<0xFF800000> : vector<1x8xf32>
    %5 = vector.multi_reduction <maximumf>, %4, %cst_6 [2] : vector<1x8x8xf32> to vector<1x8xf32>
    %6 = vector.shape_cast %5 : vector<1x8xf32> to vector<1x8x1xf32>
    %7 = vector.broadcast %6 : vector<1x8x1xf32> to vector<1x8x8xf32>
    %8 = arith.subf %4, %7 : vector<1x8x8xf32>
    %9 = math.exp %8 : vector<1x8x8xf32>
    %cst_7 = arith.constant dense<0.000000e+00> : vector<1x8xf32>
    %10 = vector.multi_reduction <add>, %9, %cst_7 [2] : vector<1x8x8xf32> to vector<1x8xf32>
    %11 = vector.shape_cast %10 : vector<1x8xf32> to vector<1x8x1xf32>
    %cst_8 = arith.constant dense<0xFF800000> : vector<1x8xf32>
    %12 = vector.multi_reduction <maximumf>, %9, %cst_8 [2] : vector<1x8x8xf32> to vector<1x8xf32>
    %13 = vector.shape_cast %12 : vector<1x8xf32> to vector<1x8x1xf32>
    %14 = vector.broadcast %13 : vector<1x8x1xf32> to vector<1x8x8xf32>
    %15 = arith.cmpf oeq, %9, %14 : vector<1x8x8xf32>
    %cst_9 = arith.constant 0.000000e+00 : f32
    %16 = vector.broadcast %cst_9 : f32 to vector<1x8x8xf32>
    %17 = arith.select %15, %16, %9 : vector<1x8x8xi1>, vector<1x8x8xf32>
    %cst_10 = arith.constant dense<0xFF800000> : vector<1x8xf32>
    %18 = vector.multi_reduction <maximumf>, %17, %cst_10 [2] : vector<1x8x8xf32> to vector<1x8xf32>
    %19 = vector.shape_cast %18 : vector<1x8xf32> to vector<1x8x1xf32>
    %20 = vector.broadcast %19 : vector<1x8x1xf32> to vector<1x8x8xf32>
    %21 = arith.cmpf oeq, %17, %20 : vector<1x8x8xf32>
    %cst_11 = arith.constant 0.000000e+00 : f32
    %22 = vector.broadcast %cst_11 : f32 to vector<1x8x8xf32>
    %23 = arith.select %21, %22, %17 : vector<1x8x8xi1>, vector<1x8x8xf32>
    %cst_12 = arith.constant dense<0xFF800000> : vector<1x8xf32>
    %24 = vector.multi_reduction <maximumf>, %23, %cst_12 [2] : vector<1x8x8xf32> to vector<1x8xf32>
    %25 = vector.shape_cast %24 : vector<1x8xf32> to vector<1x8x1xf32>
    %26 = vector.broadcast %25 : vector<1x8x1xf32> to vector<1x8x8xf32>
    %27 = arith.cmpf oeq, %23, %26 : vector<1x8x8xf32>
    %cst_13 = arith.constant 0.000000e+00 : f32
    %28 = vector.broadcast %cst_13 : f32 to vector<1x8x8xf32>
    %29 = arith.select %27, %28, %23 : vector<1x8x8xi1>, vector<1x8x8xf32>
    %cst_14 = arith.constant dense<0xFF800000> : vector<1x8xf32>
    %30 = vector.multi_reduction <maximumf>, %29, %cst_14 [2] : vector<1x8x8xf32> to vector<1x8xf32>
    %31 = vector.shape_cast %30 : vector<1x8xf32> to vector<1x8x1xf32>
    %cst_15 = arith.constant 1.000000e-07 : f32
    %32 = vector.broadcast %cst_15 : f32 to vector<1x8x1xf32>
    %33 = arith.mulf %32, %11 : vector<1x8x1xf32>
    %34 = arith.addf %31, %33 : vector<1x8x1xf32>
    %35 = vector.broadcast %34 : vector<1x8x1xf32> to vector<1x8x8xf32>
    %36 = arith.subf %9, %35 : vector<1x8x8xf32>
    %cst_16 = arith.constant 0.000000e+00 : f32
    %37 = vector.broadcast %cst_16 : f32 to vector<1x8x8xf32>
    %38 = arith.maximumf %36, %37 : vector<1x8x8xf32>
    %cst_17 = arith.constant dense<0.000000e+00> : vector<1x8xf32>
    %39 = vector.multi_reduction <add>, %38, %cst_17 [2] : vector<1x8x8xf32> to vector<1x8xf32>
    %40 = vector.shape_cast %39 : vector<1x8xf32> to vector<1x8x1xf32>
    %41 = arith.addf %40, %33 : vector<1x8x1xf32>
    %42 = tpu.reciprocal %41 {approx = true} : vector<1x8x1xf32> -> vector<1x8x1xf32>
    %43 = vector.broadcast %42 : vector<1x8x1xf32> to vector<1x8x8xf32>
    %44 = arith.mulf %38, %43 : vector<1x8x8xf32>
    %c0_18 = arith.constant 0 : index
    %c0_19 = arith.constant 0 : index
    %c0_20 = arith.constant 0 : index
    %45 = vector.load %arg4[%c0_18, %c0_19, %c0_20] : memref<1x8x32xf32, #tpu.memory_space<vmem>>, vector<1x8x32xf32>
    "tpu.trace_start"() <{level = 10 : i32, message = "bqk,bkd->bqd"}> : () -> ()
    %cst_21 = arith.constant dense<0.000000e+00> : vector<1x8x32xf32>
    %46 = tpu.matmul %44, %45, %cst_21 {dimension_numbers = #tpu.dot_dimension_numbers<[2], [1], [1], [2], [0, 0, 0, 1, 1, 2], [0], [0]>} : vector<1x8x8xf32>, vector<1x8x32xf32>, vector<1x8x32xf32> -> vector<1x8x32xf32>
    "tpu.trace_stop"() : () -> ()
    %c0_22 = arith.constant 0 : index
    %c0_23 = arith.constant 0 : index
    %c0_24 = arith.constant 0 : index
    %47 = vector.load %arg5[%c0_22, %c0_23, %c0_24] : memref<1x8x32xf32, #tpu.memory_space<vmem>>, vector<1x8x32xf32>
    tpu.vector_store %arg5[%c0_22, %c0_23, %c0_24], %46 {strides = array<i32>} : memref<1x8x32xf32, #tpu.memory_space<vmem>>, vector<1x8x32xf32>,
    %c0_25 = arith.constant 0 : index
    %c0_26 = arith.constant 0 : index
    %c0_27 = arith.constant 0 : index
    %48 = vector.load %arg6[%c0_25, %c0_26, %c0_27] : memref<1x8x8xf32, #tpu.memory_space<vmem>>, vector<1x8x8xf32>
    tpu.vector_store %arg6[%c0_25, %c0_26, %c0_27], %44 {strides = array<i32>} : memref<1x8x8xf32, #tpu.memory_space<vmem>>, vector<1x8x8xf32>,
    return
  }
  func.func @transform_0(%arg0: i32, %arg1: i32) -> (i32, i32, i32) {
    %c0_i32 = arith.constant 0 : i32
    %c0_i32_0 = arith.constant 0 : i32
    return %arg0, %arg1, %c0_i32 : i32, i32, i32
  }
  func.func @transform_1(%arg0: i32, %arg1: i32) -> (i32, i32, i32) {
    %c0_i32 = arith.constant 0 : i32
    %c0_i32_0 = arith.constant 0 : i32
    %c0_i32_1 = arith.constant 0 : i32
    return %arg0, %c0_i32, %c0_i32_0 : i32, i32, i32
  }
  func.func @transform_2(%arg0: i32, %arg1: i32) -> (i32, i32, i32) {
    %c0_i32 = arith.constant 0 : i32
    %c0_i32_0 = arith.constant 0 : i32
    %c0_i32_1 = arith.constant 0 : i32
    return %arg0, %c0_i32, %c0_i32_0 : i32, i32, i32
  }
  func.func @transform_3(%arg0: i32, %arg1: i32) -> (i32, i32, i32) {
    %c0_i32 = arith.constant 0 : i32
    %c0_i32_0 = arith.constant 0 : i32
    return %arg0, %arg1, %c0_i32 : i32, i32, i32
  }
  func.func @transform_4(%arg0: i32, %arg1: i32) -> (i32, i32, i32) {
    %c0_i32 = arith.constant 0 : i32
    %c0_i32_0 = arith.constant 0 : i32
    return %arg0, %arg1, %c0_i32 : i32, i32, i32
  }
}

</mosaic_0001>

<llo_original>
// kernel: tpu_custom_call.1
$region0: #{tpu_custom_call.1}
  #allocation0 [shape = 'u32[]', space=smem, size = 0x4, offset = 0x4, fixed_abs, tag = 'smem constant byte address 0x4 - core index']
  #allocation1 [shape = 'u32[144,128]{1,0:T(1,128)}', space=vmem, size = 0x12000, scoped, tag = 'internal scratch']
  %s0 = inlined_call_operand.hbm [shape: f32[2,8,32], index: 0, kind: input, shape index: {}]
  %s1 = inlined_call_operand.hbm [shape: f32[2,8,32], index: 1, kind: input, shape index: {}]
  %s2 = inlined_call_operand.hbm [shape: f32[2,8,32], index: 2, kind: input, shape index: {}]
  %s3 = inlined_call_operand.hbm [shape: f32[2,8,32], index: 3, kind: output, shape index: {0}]
  %s4 = inlined_call_operand.hbm [shape: f32[2,8,8], index: 4, kind: output, shape index: {1}]
  %5 = xla_tuple %s3, %s4
  %s6 = sld [smem:[#allocation0]]
  $region65: #{tpu_custom_call.1} parent=0
    _
  %s8 = ssub.s32 1, %s6
  %s9 = scalar_select 0, %s8, %s6
  $region1: #{tpu_custom_call.1} parent=0
    #allocation2 [shape = 'u8[8192]{0}', space=vmem, size = 0x2000, scoped, tag = 'input window, operand 0']
    #allocation3 [shape = 's32[2]{0}', space=sflag, size = 0x8, scoped, tag = 'scoped memory for tpu_custom_call.1']
    #allocation4 [shape = 's32[2]{0}', space=sflag, size = 0x8, scoped, tag = 'scoped memory for tpu_custom_call.1']
    #allocation5 [shape = 'u8[8192]{0}', space=vmem, size = 0x2000, scoped, tag = 'input window, operand 1']
    #allocation6 [shape = 's32[2]{0}', space=sflag, size = 0x8, scoped, tag = 'scoped memory for tpu_custom_call.1']
    #allocation7 [shape = 'u8[8192]{0}', space=vmem, size = 0x2000, scoped, tag = 'input window, operand 2']
    #allocation8 [shape = 'u8[8192]{0}', space=vmem, size = 0x2000, scoped, tag = 'output window, operand 0']
    #allocation9 [shape = 'u8[8192]{0}', space=vmem, size = 0x2000, scoped, tag = 'output window, operand 1']
    #allocation10 [shape = 's32[2]{0}', space=sflag, size = 0x8, scoped, tag = 'scoped memory for tpu_custom_call.1']
    %10 = vsyncpa [#allocation3], 0
    %s11 = scalar_lea.sflag [#allocation3], 1
    %12 = vsyncpa %s11, 0
    %13 = vsyncpa [#allocation6], 0
    %s14 = scalar_lea.sflag [#allocation6], 1
    %15 = vsyncpa %s14, 0
    %16 = vsyncpa [#allocation4], 0
    %s17 = scalar_lea.sflag [#allocation4], 1
    %18 = vsyncpa %s17, 0
    %19 = vsyncpa [#allocation10], 0
    %s20 = scalar_lea.sflag [#allocation10], 1
    %21 = vsyncpa %s20, 0
    loop: start=0, step=1, limit=4
    $region2: #{tpu_custom_call.1} parent=1 // loop_pre_header
      _
    $region3: #{tpu_custom_call.1} parent=1 // loop_header
      %s23 = sphi 0, %s27
      %p24 = scmp.ge.s32.totalorder %s23, 4
      %s30 = sphi 0, %s42
      %s31 = sphi 0, %s38
      %s32 = sphi 0, %s30
      %s33 = sphi 0, %s31
      %s34 = sphi 0, %s32
      %s35 = sphi 0, %s33
      %s47 = sphi 0, %s49
      %s50 = sphi 0, %s47
      %s51 = sphi 0, %s50
      %s67 = sphi 0, %s51
      %s73 = sphi 0, %s75
      %s76 = sphi 0, %s73
      %s77 = sphi 0, %s76
      %s93 = sphi 0, %s77
      %s99 = sphi 0, %s101
      %s102 = sphi 0, %s99
      %s103 = sphi 0, %s102
      %s119 = sphi 0, %s103
      %s127 = sphi 0, %s129
      %s130 = sphi 0, %s127
      %s131 = sphi 0, %s130
      %s147 = sphi 0, %s131
      %s155 = sphi 0, %s157
      %s158 = sphi 0, %s155
      %s159 = sphi 0, %s158
      %s175 = sphi 0, %s159
    $region4: #{tpu_custom_call.1} parent=1 // loop_header_branch
      %26 = sbr.rel (%p24) target = $region8
    $region5: #{tpu_custom_call.1} parent=1 // loop_body
      %s28 = ssub.s32 %s23, 1
      %s29 = ssub.s32 %s23, 2
      %s36 = sadd.s32 1, %s31
      %p37 = scmp.ge.s32.totalorder %s36, 1
      %s38 = scalar_select %p37, 0, %s36
      %s39 = sadd.s32 1, %s30
      %s40 = scalar_select %p37, %s39, %s30
      %p41 = scmp.ge.s32.totalorder %s40, 2
      %s42 = scalar_select %p41, 0, %s40
      %s43 = ssub.s32 %s30, %s42
      %s44 = ssub.s32 %s31, %s38
      %s45 = sor.u32 %s43, %s44
      %p46 = scmp.eq.s32.totalorder %s45, 0
      %s48 = sadd.s32 %s47, 1
      %s49 = scalar_select %p46, %s47, %s48
      %p52 = pneg %p46
      %p53 = scmp.eq.s32.totalorder %s23, 1
      %p54 = por %p52, %p53
      %p55 = scmp.ne.s32.totalorder %s47, %s50
      %p56 = scmp.eq.s32.totalorder %s23, 0
      %p57 = por %p55, %p56
      %p58 = scmp.ne.s32.totalorder %s47, %s50
      %p59 = scmp.eq.s32.totalorder %s28, 1
      %p60 = por %p58, %p59
      %p61 = scmp.ne.s32.totalorder %s50, %s51
      %p62 = scmp.eq.s32.totalorder %s28, 0
      %p63 = por %p61, %p62
      %p64 = scmp.ne.s32.totalorder %s50, %s51
      %p65 = scmp.eq.s32.totalorder %s29, 1
      %p66 = por %p64, %p65
      %p68 = scmp.ne.s32.totalorder %s51, %s67
      %p69 = scmp.eq.s32.totalorder %s29, 0
      %p70 = por %p68, %p69
      %s71 = ssub.s32 %s30, %s42
      %p72 = scmp.eq.s32.totalorder %s71, 0
      %s74 = sadd.s32 %s73, 1
      %s75 = scalar_select %p72, %s73, %s74
      %p78 = pneg %p72
      %p79 = scmp.eq.s32.totalorder %s23, 1
      %p80 = por %p78, %p79
      %p81 = scmp.ne.s32.totalorder %s73, %s76
      %p82 = scmp.eq.s32.totalorder %s23, 0
      %p83 = por %p81, %p82
      %p84 = scmp.ne.s32.totalorder %s73, %s76
      %p85 = scmp.eq.s32.totalorder %s28, 1
      %p86 = por %p84, %p85
      %p87 = scmp.ne.s32.totalorder %s76, %s77
      %p88 = scmp.eq.s32.totalorder %s28, 0
      %p89 = por %p87, %p88
      %p90 = scmp.ne.s32.totalorder %s76, %s77
      %p91 = scmp.eq.s32.totalorder %s29, 1
      %p92 = por %p90, %p91
      %p94 = scmp.ne.s32.totalorder %s77, %s93
      %p95 = scmp.eq.s32.totalorder %s29, 0
      %p96 = por %p94, %p95
      %s97 = ssub.s32 %s30, %s42
      %p98 = scmp.eq.s32.totalorder %s97, 0
      %s100 = sadd.s32 %s99, 1
      %s101 = scalar_select %p98, %s99, %s100
      %p104 = pneg %p98
      %p105 = scmp.eq.s32.totalorder %s23, 1
      %p106 = por %p104, %p105
      %p107 = scmp.ne.s32.totalorder %s99, %s102
      %p108 = scmp.eq.s32.totalorder %s23, 0
      %p109 = por %p107, %p108
      %p110 = scmp.ne.s32.totalorder %s99, %s102
      %p111 = scmp.eq.s32.totalorder %s28, 1
      %p112 = por %p110, %p111
      %p113 = scmp.ne.s32.totalorder %s102, %s103
      %p114 = scmp.eq.s32.totalorder %s28, 0
      %p115 = por %p113, %p114
      %p116 = scmp.ne.s32.totalorder %s102, %s103
      %p117 = scmp.eq.s32.totalorder %s29, 1
      %p118 = por %p116, %p117
      %p120 = scmp.ne.s32.totalorder %s103, %s119
      %p121 = scmp.eq.s32.totalorder %s29, 0
      %p122 = por %p120, %p121
      %s123 = ssub.s32 %s30, %s42
      %s124 = ssub.s32 %s31, %s38
      %s125 = sor.u32 %s123, %s124
      %p126 = scmp.eq.s32.totalorder %s125, 0
      %s128 = sadd.s32 %s127, 1
      %s129 = scalar_select %p126, %s127, %s128
      %p132 = pneg %p126
      %p133 = scmp.eq.s32.totalorder %s23, 1
      %p134 = por %p132, %p133
      %p135 = scmp.ne.s32.totalorder %s127, %s130
      %p136 = scmp.eq.s32.totalorder %s23, 0
      %p137 = por %p135, %p136
      %p138 = scmp.ne.s32.totalorder %s127, %s130
      %p139 = scmp.eq.s32.totalorder %s28, 1
      %p140 = por %p138, %p139
      %p141 = scmp.ne.s32.totalorder %s130, %s131
      %p142 = scmp.eq.s32.totalorder %s28, 0
      %p143 = por %p141, %p142
      %p144 = scmp.ne.s32.totalorder %s130, %s131
      %p145 = scmp.eq.s32.totalorder %s29, 1
      %p146 = por %p144, %p145
      %p148 = scmp.ne.s32.totalorder %s131, %s147
      %p149 = scmp.eq.s32.totalorder %s29, 0
      %p150 = por %p148, %p149
      %s151 = ssub.s32 %s30, %s42
      %s152 = ssub.s32 %s31, %s38
      %s153 = sor.u32 %s151, %s152
      %p154 = scmp.eq.s32.totalorder %s153, 0
      %s156 = sadd.s32 %s155, 1
      %s157 = scalar_select %p154, %s155, %s156
      %p160 = pneg %p154
      %p161 = scmp.eq.s32.totalorder %s23, 1
      %p162 = por %p160, %p161
      %p163 = scmp.ne.s32.totalorder %s155, %s158
      %p164 = scmp.eq.s32.totalorder %s23, 0
      %p165 = por %p163, %p164
      %p166 = scmp.ne.s32.totalorder %s155, %s158
      %p167 = scmp.eq.s32.totalorder %s28, 1
      %p168 = por %p166, %p167
      %p169 = scmp.ne.s32.totalorder %s158, %s159
      %p170 = scmp.eq.s32.totalorder %s28, 0
      %p171 = por %p169, %p170
      %p172 = scmp.ne.s32.totalorder %s158, %s159
      %p173 = scmp.eq.s32.totalorder %s29, 1
      %p174 = por %p172, %p173
      %p176 = scmp.ne.s32.totalorder %s159, %s175
      %p177 = scmp.eq.s32.totalorder %s29, 0
      %p178 = por %p176, %p177
      %p179 = scmp.le.s32.totalorder 1, %s23
      %p180 = scmp.lt.s32.totalorder %s23, 3
      %p181 = pnand %p179, %p180
      %p182 = pneg %p181
      // Predicated region
      $region9: #{tpu_custom_call.1} parent=5 // pred_check
        _
      $region10: #{tpu_custom_call.1} parent=5 // pred_check_branch
        %184 = sbr.rel (%p181) target = $region12
      $region11: #{tpu_custom_call.1} parent=5 // pred_region
        %s185 = ssub.s32 %s23, 1
      $region12: #{tpu_custom_call.1} parent=5 // pred_fallthru
        _
      %p186 = scmp.lt.s32.totalorder %s23, 2
      // Predicated region
      $region13: #{tpu_custom_call.1} parent=5 // pred_check
        %p187 = pneg %p186
      $region14: #{tpu_custom_call.1} parent=5 // pred_check_branch
        %189 = sbr.rel (%p187) target = $region16
      $region15: #{tpu_custom_call.1} parent=5 // pred_region
        // Predicated region
        $region17: #{tpu_custom_call.1} parent=15 // pred_check
          %p190 = pneg %p57
        $region18: #{tpu_custom_call.1} parent=15 // pred_check_branch
          %192 = sbr.rel (%p190) target = $region20
        $region19: #{tpu_custom_call.1} parent=15 // pred_region
          %s193 = sand.u32 %s47, 1
          %s194 = scalar_lea.sflag [#allocation3], %s193
          %s195 = sand.u32 %s47, 1
          %s196 = smul.addr %s195, 8
          %s197 = scalar_lea.vmem [#allocation2], %s196
          %s199 = ssub.s32 128, 128
          %200 = vsyncadd %s194, %s199
          %s201 = sadd.s32 %s31, %s30
          %s202 = smul.addr %s201, 128
          %s203 = scalar_lea.hbm %s0, %s202
          %s205 = sshll.u32 %s197, 4
          %s206 = int_to_ptr.vmem [resolvable:$true] %s205
          %208 = dma.hbm_to_vmem [thread:$0]  %s203, 128, %s206, %s194
        $region20: #{tpu_custom_call.1} parent=15 // pred_fallthru
          _
        // Predicated region
        $region21: #{tpu_custom_call.1} parent=15 // pred_check
          %p209 = pneg %p83
        $region22: #{tpu_custom_call.1} parent=15 // pred_check_branch
          %211 = sbr.rel (%p209) target = $region24
        $region23: #{tpu_custom_call.1} parent=15 // pred_region
          %s212 = sand.u32 %s23, 1
          %s213 = scalar_lea.sflag [#allocation6], %s212
          %s214 = sand.u32 %s73, 1
          %s215 = smul.addr %s214, 8
          %s216 = scalar_lea.vmem [#allocation5], %s215
          %s218 = ssub.s32 128, 128
          %219 = vsyncadd %s213, %s218
          %s220 = smul.addr %s30, 128
          %s221 = scalar_lea.hbm %s1, %s220
          %s223 = sshll.u32 %s216, 4
          %s224 = int_to_ptr.vmem [resolvable:$true] %s223
          %226 = dma.hbm_to_vmem [thread:$0]  %s221, 128, %s224, %s213
        $region24: #{tpu_custom_call.1} parent=15 // pred_fallthru
          _
        // Predicated region
        $region25: #{tpu_custom_call.1} parent=15 // pred_check
          %p227 = pneg %p109
        $region26: #{tpu_custom_call.1} parent=15 // pred_check_branch
          %229 = sbr.rel (%p227) target = $region28
        $region27: #{tpu_custom_call.1} parent=15 // pred_region
          %s230 = sand.u32 %s23, 1
          %s231 = scalar_lea.sflag [#allocation6], %s230
          %s232 = sand.u32 %s99, 1
          %s233 = smul.addr %s232, 8
          %s234 = scalar_lea.vmem [#allocation7], %s233
          %s236 = ssub.s32 128, 128
          %237 = vsyncadd %s231, %s236
          %s238 = smul.addr %s30, 128
          %s239 = scalar_lea.hbm %s2, %s238
          %s241 = sshll.u32 %s234, 4
          %s242 = int_to_ptr.vmem [resolvable:$true] %s241
          %244 = dma.hbm_to_vmem [thread:$0]  %s239, 128, %s242, %s231
        $region28: #{tpu_custom_call.1} parent=15 // pred_fallthru
          _
      $region16: #{tpu_custom_call.1} parent=5 // pred_fallthru
        _
      %p245 = scmp.le.s32.totalorder 1, %s23
      %p246 = scmp.lt.s32.totalorder %s23, 3
      %p247 = pnand %p245, %p246
      %p248 = pneg %p247
      // Predicated region
      $region29: #{tpu_custom_call.1} parent=5 // pred_check
        _
      $region30: #{tpu_custom_call.1} parent=5 // pred_check_branch
        %250 = sbr.rel (%p247) target = $region32
      $region31: #{tpu_custom_call.1} parent=5 // pred_region
        %s251 = ssub.s32 %s23, 1
        %s252 = sand.u32 %s50, 1
        %s253 = scalar_lea.sflag [#allocation3], %s252
        %s254 = sand.u32 %s50, 1
        %s255 = smul.addr %s254, 8
        %s256 = scalar_lea.vmem [#allocation2], %s255
        // Predicated region
        $region33: #{tpu_custom_call.1} parent=31 // pred_check
          %p257 = pneg %p63
        $region34: #{tpu_custom_call.1} parent=31 // pred_check_branch
          %259 = sbr.rel (%p257) target = $region36
        $region35: #{tpu_custom_call.1} parent=31 // pred_region
          %260 = dma.done %s253, 128
        $region36: #{tpu_custom_call.1} parent=31 // pred_fallthru
          _
        %s261 = sand.u32 %s28, 1
        %s262 = scalar_lea.sflag [#allocation6], %s261
        %s263 = sand.u32 %s76, 1
        %s264 = smul.addr %s263, 8
        %s265 = scalar_lea.vmem [#allocation5], %s264
        // Predicated region
        $region37: #{tpu_custom_call.1} parent=31 // pred_check
          %p266 = pneg %p89
        $region38: #{tpu_custom_call.1} parent=31 // pred_check_branch
          %268 = sbr.rel (%p266) target = $region40
        $region39: #{tpu_custom_call.1} parent=31 // pred_region
          %269 = dma.done %s262, 128
        $region40: #{tpu_custom_call.1} parent=31 // pred_fallthru
          _
        %s270 = sand.u32 %s28, 1
        %s271 = scalar_lea.sflag [#allocation6], %s270
        %s272 = sand.u32 %s102, 1
        %s273 = smul.addr %s272, 8
        %s274 = scalar_lea.vmem [#allocation7], %s273
        // Predicated region
        $region41: #{tpu_custom_call.1} parent=31 // pred_check
          %p275 = pneg %p115
        $region42: #{tpu_custom_call.1} parent=31 // pred_check_branch
          %277 = sbr.rel (%p275) target = $region44
        $region43: #{tpu_custom_call.1} parent=31 // pred_region
          %278 = dma.done %s271, 128
        $region44: #{tpu_custom_call.1} parent=31 // pred_fallthru
          _
        %s279 = sand.u32 %s50, 1
        %s280 = scalar_lea.sflag [#allocation3], %s279
        %s281 = sand.u32 %s50, 1
        %s282 = smul.addr %s281, 8
        %s283 = scalar_lea.vmem [#allocation2], %s282
        %p284 = pneg %p63
        %p285 = pneg %p60
        %s286 = sand.u32 %s28, 1
        %s287 = scalar_lea.sflag [#allocation6], %s286
        %s288 = sand.u32 %s76, 1
        %s289 = smul.addr %s288, 8
        %s290 = scalar_lea.vmem [#allocation5], %s289
        %p291 = pneg %p89
        %p292 = pneg %p86
        %s293 = sand.u32 %s28, 1
        %s294 = scalar_lea.sflag [#allocation6], %s293
        %s295 = sand.u32 %s102, 1
        %s296 = smul.addr %s295, 8
        %s297 = scalar_lea.vmem [#allocation7], %s296
        %p298 = pneg %p115
        %p299 = pneg %p112
        %p300 = pneg %p143
        %p301 = pneg %p140
        %s302 = sand.u32 %s130, 1
        %s303 = scalar_lea.sflag [#allocation4], %s302
        %s304 = sand.u32 %s130, 1
        %s305 = smul.addr %s304, 8
        %s306 = scalar_lea.vmem [#allocation8], %s305
        %p307 = pneg %p171
        %p308 = pneg %p168
        %s309 = sand.u32 %s158, 1
        %s310 = scalar_lea.sflag [#allocation10], %s309
        %s311 = sand.u32 %s158, 1
        %s312 = smul.addr %s311, 8
        %s313 = scalar_lea.vmem [#allocation9], %s312
        %v314 = vld [vmem:[%s256] sm:$0xff]
        %v315 = vld [vmem:[%s265] sm:$0xff]
        %vm316 = vcmask 261120
        %v318 = vsel %vm316, %v314, 0
        %v321 = vsel %vm316, %v315, 0
        %323 = vmatprep.subr.mxu0 0.0
        %324 = vmatpush1.xpose.msra.mxu0 %v321
        %325 = vmatprep.subr.mxu0 0.0
        %326 = vmatpush1.xpose.msra.mxu0 0.0
        %327 = vmatprep.subr.mxu0 0.0
        %328 = vmatpush1.xpose.msra.mxu0 0.0
        %329 = vmatprep.subr.mxu0 0.0
        %330 = vmatpush1.xpose.msra.mxu0 0.0
        %331 = vmatprep.subr.mxu0 0.0
        %332 = vmatpush1.xpose.msra.mxu0 0.0
        %333 = vmatprep.subr.mxu0 0.0
        %334 = vmatpush1.xpose.msra.mxu0 0.0
        %335 = vmatprep.subr.mxu0 0.0
        %336 = vmatpush1.xpose.msra.mxu0 0.0
        %337 = vmatprep.subr.mxu0 0.0
        %338 = vmatpush1.xpose.msra.mxu0 0.0
        %339 = vmatprep.subr.mxu0 0.0
        %340 = vmatpush1.xpose.msra.mxu0 0.0
        %341 = vmatprep.subr.mxu0 0.0
        %342 = vmatpush1.xpose.msra.mxu0 0.0
        %343 = vmatprep.subr.mxu0 0.0
        %344 = vmatpush1.xpose.msra.mxu0 0.0
        %345 = vmatprep.subr.mxu0 0.0
        %346 = vmatpush1.xpose.msra.mxu0 0.0
        %347 = vmatprep.subr.mxu0 0.0
        %348 = vmatpush1.xpose.msra.mxu0 0.0
        %349 = vmatprep.subr.mxu0 0.0
        %350 = vmatpush1.xpose.msra.mxu0 0.0
        %351 = vmatprep.subr.mxu0 0.0
        %352 = vmatpush1.xpose.msra.mxu0 0.0
        %353 = vmatprep.subr.mxu0 0.0
        %354 = vmatpush1.xpose.msra.mxu0 0.0
        %355 = vmatprep.subr.mxu0 0.0
        %356 = vmatpush1.xpose.msra.mxu0 0.0
        %357 = vmatprep.subr.mxu0 0.0
        %358 = vmatpush1.xpose.msra.mxu0 0.0
        %359 = vmatprep.subr.mxu0 0.0
        %360 = vmatpush1.xpose.msra.mxu0 0.0
        %361 = vmatprep.subr.mxu0 0.0
        %362 = vmatpush1.xpose.msra.mxu0 0.0
        %363 = vmatprep.subr.mxu0 0.0
        %364 = vmatpush1.xpose.msra.mxu0 0.0
        %365 = vmatprep.subr.mxu0 0.0
        %366 = vmatpush1.xpose.msra.mxu0 0.0
        %367 = vmatprep.subr.mxu0 0.0
        %368 = vmatpush1.xpose.msra.mxu0 0.0
        %369 = vmatprep.subr.mxu0 0.0
        %370 = vmatpush1.xpose.msra.mxu0 0.0
        %371 = vmatprep.subr.mxu0 0.0
        %372 = vmatpush1.xpose.msra.mxu0 0.0
        %373 = vmatprep.subr.mxu0 0.0
        %374 = vmatpush1.xpose.msra.mxu0 0.0
        %375 = vmatprep.subr.mxu0 0.0
        %376 = vmatpush1.xpose.msra.mxu0 0.0
        %377 = vmatprep.subr.mxu0 0.0
        %378 = vmatpush1.xpose.msra.mxu0 0.0
        %379 = vmatprep.subr.mxu0 0.0
        %380 = vmatpush1.xpose.msra.mxu0 0.0
        %381 = vmatprep.subr.mxu0 0.0
        %382 = vmatpush1.xpose.msra.mxu0 0.0
        %383 = vmatprep.subr.mxu0 0.0
        %384 = vmatpush1.xpose.msra.mxu0 0.0
        %385 = vmatprep.subr.mxu0 0.0
        %386 = vmatpush1.xpose.msra.mxu0 0.0
        %387 = vmatprep.mubr.f32.mxu0 0.0
        %388 = vmatmul.mubr.f32.gmra.mrb[0].mxu0 %v318
        %v389 = vpop.f32.mrb[0].mxu0
        %v390 = vadd.f32 0.0, %v389
        %v391 = vpop.f32.mrb[0].mxu0
        %392 = vdwg.mxu0
        %v393 = vmul.f32 %v390, 0.17677669
        %vm394 = vcmask 64512
        %v395 = vsel %vm394, %v393, -inf
        %396 = vmax.xlane.f32.xlu0 %v395
        %v397 = vpop.xlane.xlu0 %396
        %v398 = vsub.f32 %v393, %v397
        %v399 = vmul.f32 %v398, 1.442695
        %v400 = vpow.pop %v399
        %v401 = vsel %vm394, %v400, 0.0
        %402 = vadd.xlane.f32.xlu0 %v401
        %v403 = vpop.xlane.xlu0 %402
        %v404 = vsel %vm394, %v400, -inf
        %405 = vmax.xlane.f32.xlu0 %v404
        %v406 = vpop.xlane.xlu0 %405
        %vm407 = vcmp.eq.f32.partialorder %v400, %v406
        %v408 = vsel %vm407, 0.0, %v400
        %v409 = vsel %vm394, %v408, -inf
        %410 = vmax.xlane.f32.xlu0 %v409
        %v411 = vpop.xlane.xlu0 %410
        %vm412 = vcmp.eq.f32.partialorder %v408, %v411
        %v413 = vsel %vm412, 0.0, %v408
        %v414 = vsel %vm394, %v413, -inf
        %415 = vmax.xlane.f32.xlu0 %v414
        %v416 = vpop.xlane.xlu0 %415
        %vm417 = vcmp.eq.f32.partialorder %v413, %v416
        %v418 = vsel %vm417, 0.0, %v413
        %v419 = vsel %vm394, %v418, -inf
        %420 = vmax.xlane.f32.xlu0 %v419
        %v421 = vpop.xlane.xlu0 %420
        %v422 = vmul.f32 %v403, 1e-07
        %v423 = vadd.f32 %v421, %v422
        %v424 = vsub.f32 %v400, %v423
        %v425 = vmax.f32 %v424, 0.0
        %v426 = vsel %vm394, %v425, 0.0
        %427 = vadd.xlane.f32.xlu0 %v426
        %v428 = vpop.xlane.xlu0 %427
        %v429 = vadd.f32 %v428, %v422
        %v430 = vrcp.pop %v429
        %v431 = vmul.f32 %v425, %v430
        %v432 = vld [vmem:[%s274] sm:$0xff]
        %v434 = vsel %vm394, %v431, 0
        %436 = vmatprep.subr.mxu0 0.0
        %437 = vmatpush1.msra.mxu0 %v432
        %438 = vmatprep.subr.mxu0 0.0
        %439 = vmatpush1.msra.mxu0 0.0
        %440 = vmatprep.subr.mxu0 0.0
        %441 = vmatpush1.msra.mxu0 0.0
        %442 = vmatprep.subr.mxu0 0.0
        %443 = vmatpush1.msra.mxu0 0.0
        %444 = vmatprep.subr.mxu0 0.0
        %445 = vmatpush1.msra.mxu0 0.0
        %446 = vmatprep.subr.mxu0 0.0
        %447 = vmatpush1.msra.mxu0 0.0
        %448 = vmatprep.subr.mxu0 0.0
        %449 = vmatpush1.msra.mxu0 0.0
        %450 = vmatprep.subr.mxu0 0.0
        %451 = vmatpush1.msra.mxu0 0.0
        %452 = vmatprep.subr.mxu0 0.0
        %453 = vmatpush1.msra.mxu0 0.0
        %454 = vmatprep.subr.mxu0 0.0
        %455 = vmatpush1.msra.mxu0 0.0
        %456 = vmatprep.subr.mxu0 0.0
        %457 = vmatpush1.msra.mxu0 0.0
        %458 = vmatprep.subr.mxu0 0.0
        %459 = vmatpush1.msra.mxu0 0.0
        %460 = vmatprep.subr.mxu0 0.0
        %461 = vmatpush1.msra.mxu0 0.0
        %462 = vmatprep.subr.mxu0 0.0
        %463 = vmatpush1.msra.mxu0 0.0
        %464 = vmatprep.subr.mxu0 0.0
        %465 = vmatpush1.msra.mxu0 0.0
        %466 = vmatprep.subr.mxu0 0.0
        %467 = vmatpush1.msra.mxu0 0.0
        %468 = vmatprep.subr.mxu0 0.0
        %469 = vmatpush1.msra.mxu0 0.0
        %470 = vmatprep.subr.mxu0 0.0
        %471 = vmatpush1.msra.mxu0 0.0
        %472 = vmatprep.subr.mxu0 0.0
        %473 = vmatpush1.msra.mxu0 0.0
        %474 = vmatprep.subr.mxu0 0.0
        %475 = vmatpush1.msra.mxu0 0.0
        %476 = vmatprep.subr.mxu0 0.0
        %477 = vmatpush1.msra.mxu0 0.0
        %478 = vmatprep.subr.mxu0 0.0
        %479 = vmatpush1.msra.mxu0 0.0
        %480 = vmatprep.subr.mxu0 0.0
        %481 = vmatpush1.msra.mxu0 0.0
        %482 = vmatprep.subr.mxu0 0.0
        %483 = vmatpush1.msra.mxu0 0.0
        %484 = vmatprep.subr.mxu0 0.0
        %485 = vmatpush1.msra.mxu0 0.0
        %486 = vmatprep.subr.mxu0 0.0
        %487 = vmatpush1.msra.mxu0 0.0
        %488 = vmatprep.subr.mxu0 0.0
        %489 = vmatpush1.msra.mxu0 0.0
        %490 = vmatprep.subr.mxu0 0.0
        %491 = vmatpush1.msra.mxu0 0.0
        %492 = vmatprep.subr.mxu0 0.0
        %493 = vmatpush1.msra.mxu0 0.0
        %494 = vmatprep.subr.mxu0 0.0
        %495 = vmatpush1.msra.mxu0 0.0
        %496 = vmatprep.subr.mxu0 0.0
        %497 = vmatpush1.msra.mxu0 0.0
        %498 = vmatprep.subr.mxu0 0.0
        %499 = vmatpush1.msra.mxu0 0.0
        %500 = vmatprep.mubr.f32.mxu0 0.0
        %501 = vmatmul.mubr.f32.gmra.mrb[0].mxu0 %v434
        %v502 = vpop.f32.mrb[0].mxu0
        %v503 = vadd.f32 0.0, %v502
        %v504 = vpop.f32.mrb[0].mxu0
        %505 = vdwg.mxu0
        %506 = vst.msk [vmem:[%s306] sm:$0xff] %vm316, %v503
        %507 = vst.msk [vmem:[%s313] sm:$0xff] %vm394, %v431
        %s508 = sand.u32 %s130, 1
        %s509 = scalar_lea.sflag [#allocation4], %s508
        %s510 = sand.u32 %s130, 1
        %s511 = smul.addr %s510, 8
        %s512 = scalar_lea.vmem [#allocation8], %s511
        %s513 = sand.u32 %s158, 1
        %s514 = scalar_lea.sflag [#allocation10], %s513
        %s515 = sand.u32 %s158, 1
        %s516 = smul.addr %s515, 8
        %s517 = scalar_lea.vmem [#allocation9], %s516
        // Predicated region
        $region45: #{tpu_custom_call.1} parent=31 // pred_check
          %p518 = pneg %p140
        $region46: #{tpu_custom_call.1} parent=31 // pred_check_branch
          %520 = sbr.rel (%p518) target = $region48
        $region47: #{tpu_custom_call.1} parent=31 // pred_region
          %s522 = ssub.s32 128, 128
          %523 = vsyncadd %s509, %s522
          %s524 = sadd.s32 %s33, %s32
          %s525 = smul.addr %s524, 128
          %s526 = scalar_lea.hbm %s3, %s525
          %s528 = sshll.u32 %s512, 4
          %s529 = int_to_ptr.vmem [resolvable:$true] %s528
          %531 = dma.vmem_to_hbm [thread:$0]  %s529, 128, %s526, %s509
        $region48: #{tpu_custom_call.1} parent=31 // pred_fallthru
          _
        // Predicated region
        $region49: #{tpu_custom_call.1} parent=31 // pred_check
          %p532 = pneg %p168
        $region50: #{tpu_custom_call.1} parent=31 // pred_check_branch
          %534 = sbr.rel (%p532) target = $region52
        $region51: #{tpu_custom_call.1} parent=31 // pred_region
          %s536 = ssub.s32 128, 128
          %537 = vsyncadd %s514, %s536
          %s538 = sadd.s32 %s33, %s32
          %s539 = smul.addr %s538, 128
          %s540 = scalar_lea.hbm %s4, %s539
          %s542 = sshll.u32 %s517, 4
          %s543 = int_to_ptr.vmem [resolvable:$true] %s542
          %545 = dma.vmem_to_hbm [thread:$0]  %s543, 128, %s540, %s514
        $region52: #{tpu_custom_call.1} parent=31 // pred_fallthru
          _
      $region32: #{tpu_custom_call.1} parent=5 // pred_fallthru
        _
      %p546 = scmp.le.s32.totalorder 2, %s23
      // Predicated region
      $region53: #{tpu_custom_call.1} parent=5 // pred_check
        %p547 = pneg %p546
      $region54: #{tpu_custom_call.1} parent=5 // pred_check_branch
        %549 = sbr.rel (%p547) target = $region56
      $region55: #{tpu_custom_call.1} parent=5 // pred_region
        %s550 = ssub.s32 %s23, 2
        // Predicated region
        $region57: #{tpu_custom_call.1} parent=55 // pred_check
          %p551 = pneg %p146
        $region58: #{tpu_custom_call.1} parent=55 // pred_check_branch
          %553 = sbr.rel (%p551) target = $region60
        $region59: #{tpu_custom_call.1} parent=55 // pred_region
          %s554 = sand.u32 %s131, 1
          %s555 = scalar_lea.sflag [#allocation4], %s554
          %s556 = sand.u32 %s131, 1
          %s557 = smul.addr %s556, 8
          %s558 = scalar_lea.vmem [#allocation8], %s557
          %559 = dma.done %s555, 128
        $region60: #{tpu_custom_call.1} parent=55 // pred_fallthru
          _
        // Predicated region
        $region61: #{tpu_custom_call.1} parent=55 // pred_check
          %p560 = pneg %p174
        $region62: #{tpu_custom_call.1} parent=55 // pred_check_branch
          %562 = sbr.rel (%p560) target = $region64
        $region63: #{tpu_custom_call.1} parent=55 // pred_region
          %s563 = sand.u32 %s159, 1
          %s564 = scalar_lea.sflag [#allocation10], %s563
          %s565 = sand.u32 %s159, 1
          %s566 = smul.addr %s565, 8
          %s567 = scalar_lea.vmem [#allocation9], %s566
          %568 = dma.done %s564, 128
        $region64: #{tpu_custom_call.1} parent=55 // pred_fallthru
          _
      $region56: #{tpu_custom_call.1} parent=5 // pred_fallthru
        _
    $region6: #{tpu_custom_call.1} parent=1 // loop_footer
      %s27 = sadd.s32 1, %s23
    $region7: #{tpu_custom_call.1} parent=1 // loop_footer_branch
      %22 = sbr.rel target = $region3
    $region8: #{tpu_custom_call.1} parent=1 // loop_exit
      _
    %569 = vsyncpa [#allocation3], 1
    %s570 = scalar_lea.sflag [#allocation3], 1
    %571 = vsyncpa %s570, 1
    %572 = vsyncpa [#allocation6], 1
    %s573 = scalar_lea.sflag [#allocation6], 1
    %574 = vsyncpa %s573, 1
    %575 = vsyncpa [#allocation4], 1
    %s576 = scalar_lea.sflag [#allocation4], 1
    %577 = vsyncpa %s576, 1
    %578 = vsyncpa [#allocation10], 1
    %s579 = scalar_lea.sflag [#allocation10], 1
    %580 = vsyncpa %s579, 1

</llo_original>
